<compile_context>
chip_gen: v6e
topology: v6e:2x2x1
jax: 0.10.0
libtpu: 0.0.40
codegen_flags: <defaults>
</compile_context>

<pallas_src>
import functools

import jax
import jax.numpy as jnp
from jax import lax
from jax.experimental import pallas as pl
from jax.experimental.pallas import tpu as pltpu


def _conv_elu_kernel(x_ref, w_ref, m_ref, out_ref, *, W, Cout, Bt):
    """Process Bt images per grid step, NCHW-native, no spatial padding needed.

    x_ref   : (Bt, Cin, S)   float  flattened NCHW image, S = H*W
    w_ref   : (9*Cout, Cin)  bf16   tap-major conv weights, row (3*ky+kx)*Cout+co
    m_ref   : (2, S)         f32    [has_left_neighbour, has_right_neighbour]
    out_ref : (Bt, Cout, S)  f32    conv + ELU
    """
    S = out_ref.shape[-1]
    w = w_ref[...]                      # resident (constant index map)
    m = m_ref[...]
    has_left = m[0:1, :]                # pixel column c >= 1
    has_right = m[1:2, :]               # pixel column c <= W-2

    def shift_zero(t, off):
        # result[:, p] = t[:, p + off] if 0 <= p + off < S else 0
        if off == 0:
            return t
        pad = jnp.zeros((Cout, abs(off)), jnp.float32)
        if off > 0:
            return jnp.concatenate([t[:, off:], pad], axis=1)
        return jnp.concatenate([pad, t[:, :S + off]], axis=1)

    for b in range(Bt):
        x = x_ref[b].astype(jnp.bfloat16)                         # (Cin, S)
        acc = None
        # Centre row / centre column first: the accumulator is initialised from
        # the (ky=1, kx=1) tap with no shift, no mask and no zeros broadcast.
        for ky in (1, 0, 2):
            dy = ky - 1
            wg = w[3 * ky * Cout:(3 * ky + 3) * Cout, :]          # (3*Cout, Cin)
            taps = jnp.dot(wg, x, preferred_element_type=jnp.float32)  # (3*Cout, S)
            for kx in (1, 0, 2):
                dx = kx - 1
                t = taps[kx * Cout:(kx + 1) * Cout, :]            # (Cout, S)
                contrib = shift_zero(t, dy * W + dx)
                if dx == -1:
                    contrib = contrib * has_left
                elif dx == 1:
                    contrib = contrib * has_right
                acc = contrib if acc is None else acc + contrib
        # ELU (alpha = 1), no bias.  exp(min(., 0)) keeps the untaken branch
        # overflow-free (expm1 avoided purely for lowering safety).
        out = jnp.where(acc > 0.0, acc, jnp.exp(jnp.minimum(acc, 0.0)) - 1.0)
        out_ref[b] = out.astype(out_ref.dtype)


def _pick_bt(n, bytes_per_image):
    """Images per grid step: largest divisor of n that keeps >= 2 grid steps
    (so both v7x TensorCores get work), stays under a modest VMEM budget for
    the double-buffered input block, and keeps in-kernel unrolling small."""
    budget = 4 * 1024 * 1024
    best = 1
    for bt in range(1, n + 1):
        if n % bt or bt > 8 or bt * bytes_per_image > budget:
            continue
        if n == 1 or n // bt >= 2:
            best = bt
    return best


@jax.jit
def conv_elu(x_nchw, w_oihw):
    """x_nchw: (N, Cin, H, W) float; w_oihw: (Cout, Cin, 3, 3) (PyTorch layout)."""
    N, Cin, H, W = x_nchw.shape
    Cout = w_oihw.shape[0]
    S = H * W

    # (Cout, Cin, 3, 3) -> (9*Cout, Cin); row index = (3*ky + kx)*Cout + co.
    w_all = jnp.transpose(w_oihw, (2, 3, 0, 1)).reshape(9 * Cout, Cin)
    w_all = w_all.astype(jnp.bfloat16)

    # Free reshape -- no pad, no cast, no extra HBM round trip.
    x_flat = x_nchw.reshape(N, Cin, S)

    # Tiny resident column-validity masks (built once, 2*S*4 bytes).
    col = jnp.arange(S, dtype=jnp.int32) % W
    masks = jnp.stack([(col >= 1), (col <= W - 2)]).astype(jnp.float32)   # (2, S)

    bt = _pick_bt(N, Cin * S * x_nchw.dtype.itemsize)
    grid = (N // bt,)

    kernel = functools.partial(_conv_elu_kernel, W=W, Cout=Cout, Bt=bt)
    out_flat = pl.pallas_call(
        kernel,
        out_shape=jax.ShapeDtypeStruct((N, Cout, S), jnp.float32),
        grid=grid,
        in_specs=[
            pl.BlockSpec((bt, Cin, S), lambda i: (i, 0, 0)),
            pl.BlockSpec((9 * Cout, Cin), lambda i: (0, 0)),
            pl.BlockSpec((2, S), lambda i: (0, 0)),
        ],
        out_specs=pl.BlockSpec((bt, Cout, S), lambda i: (i, 0, 0)),
        compiler_params=pltpu.CompilerParams(
            dimension_semantics=("parallel",)),
    )(x_flat, w_all, masks)

    # Free reshape back to NCHW (no de-pad slice / copy).
    return out_flat.reshape(N, Cout, H, W)


def _reference(x_nchw, w_oihw):
    """Pure-JAX reference reproducing the PyTorch ConvELU semantics."""
    conv = lax.conv_general_dilated(
        x_nchw, w_oihw, window_strides=(1, 1), padding=((1, 1), (1, 1)),
        dimension_numbers=("NCHW", "OIHW", "NCHW"))
    return jax.nn.elu(conv)


if __name__ == "__main__":
    N, Cin, Cout, H, W = 2, 32, 8, 16, 16
    key = jax.random.PRNGKey(0)
    k_x, k_w = jax.random.split(key)

    x = jax.random.normal(k_x, (N, Cin, H, W), jnp.float32)
    w = 0.05 * jax.random.normal(k_w, (Cout, Cin, 3, 3), jnp.float32)

    out = jax.block_until_ready(conv_elu(x, w))

    ref = _reference(x, w)
    assert out.shape == (N, Cout, H, W), out.shape
    # bf16 MXU inputs (f32 accumulation) -> tolerance loosened accordingly.
    max_err = float(jnp.max(jnp.abs(out - ref)))
    assert jnp.allclose(out, ref, atol=5e-2, rtol=5e-2), max_err

    print("KERNEL_OK")
</pallas_src>

<mosaic_0001>
module attributes {stable_mosaic.version = 11 : i64} {
  func.func @_conv_elu_kernel(%arg0: i32, %arg1: memref<1x32x256xf32, #tpu.memory_space<vmem>>, %arg2: memref<72x32xbf16, #tpu.memory_space<vmem>>, %arg3: memref<2x256xf32, #tpu.memory_space<vmem>>, %arg4: memref<1x8x256xf32, #tpu.memory_space<vmem>>) attributes {dimension_semantics = [#tpu.dimension_semantics<parallel>], iteration_bounds = array<i64: 2>, scalar_prefetch = 0 : i64, scratch_operands = 0 : i64, tpu.core_type = #tpu.core_type<tc>, window_params = [{transform_indices = @transform_0, window_bounds = array<i64: 1, 32, 256>}, {pipeline_mode = #tpu.pipeline_mode<synchronous>, transform_indices = @transform_1, window_bounds = array<i64: 72, 32>}, {pipeline_mode = #tpu.pipeline_mode<synchronous>, transform_indices = @transform_2, window_bounds = array<i64: 2, 256>}, {transform_indices = @transform_3, window_bounds = array<i64: 1, 8, 256>}]} {
    %c0 = arith.constant 0 : index
    %c0_0 = arith.constant 0 : index
    %0 = vector.load %arg2[%c0, %c0_0] : memref<72x32xbf16, #tpu.memory_space<vmem>>, vector<72x32xbf16>
    %c0_1 = arith.constant 0 : index
    %c0_2 = arith.constant 0 : index
    %1 = vector.load %arg3[%c0_1, %c0_2] : memref<2x256xf32, #tpu.memory_space<vmem>>, vector<2x256xf32>
    %2 = vector.extract_strided_slice %1 {offsets = [0, 0], sizes = [1, 256], strides = [1, 1]} : vector<2x256xf32> to vector<1x256xf32>
    %3 = vector.extract_strided_slice %1 {offsets = [1, 0], sizes = [1, 256], strides = [1, 1]} : vector<2x256xf32> to vector<1x256xf32>
    %c0_3 = arith.constant 0 : index
    %c0_4 = arith.constant 0 : index
    %c0_5 = arith.constant 0 : index
    %4 = vector.load %arg1[%c0_3, %c0_4, %c0_5] : memref<1x32x256xf32, #tpu.memory_space<vmem>>, vector<1x32x256xf32>
    %5 = vector.shape_cast %4 : vector<1x32x256xf32> to vector<32x256xf32>
    %6 = arith.truncf %5 : vector<32x256xf32> to vector<32x256xbf16>
    %7 = vector.extract_strided_slice %0 {offsets = [24, 0], sizes = [24, 32], strides = [1, 1]} : vector<72x32xbf16> to vector<24x32xbf16>
    %cst = arith.constant dense<0.000000e+00> : vector<24x256xf32>
    %8 = tpu.matmul %7, %6, %cst {dimension_numbers = #tpu.dot_dimension_numbers<[1], [0], [0], [1], [0, 0, 1, 1], [], []>} : vector<24x32xbf16>, vector<32x256xbf16>, vector<24x256xf32> -> vector<24x256xf32>
    %9 = vector.extract_strided_slice %8 {offsets = [8, 0], sizes = [8, 256], strides = [1, 1]} : vector<24x256xf32> to vector<8x256xf32>
    %10 = vector.extract_strided_slice %8 {offsets = [0, 0], sizes = [8, 256], strides = [1, 1]} : vector<24x256xf32> to vector<8x256xf32>
    %cst_6 = arith.constant 0.000000e+00 : f32
    %11 = vector.broadcast %cst_6 : f32 to vector<8x1xf32>
    %12 = vector.extract_strided_slice %10 {offsets = [0, 0], sizes = [8, 255], strides = [1, 1]} : vector<8x256xf32> to vector<8x255xf32>
    %13 = tpu.concatenate %11, %12 in 1 : vector<8x1xf32>, vector<8x255xf32> -> vector<8x256xf32>
    %14 = vector.broadcast %2 : vector<1x256xf32> to vector<8x256xf32>
    %15 = arith.mulf %13, %14 : vector<8x256xf32>
    %16 = arith.addf %9, %15 : vector<8x256xf32>
    %17 = vector.extract_strided_slice %8 {offsets = [16, 0], sizes = [8, 256], strides = [1, 1]} : vector<24x256xf32> to vector<8x256xf32>
    %cst_7 = arith.constant 0.000000e+00 : f32
    %18 = vector.broadcast %cst_7 : f32 to vector<8x1xf32>
    %19 = vector.extract_strided_slice %17 {offsets = [0, 1], sizes = [8, 255], strides = [1, 1]} : vector<8x256xf32> to vector<8x255xf32>
    %20 = tpu.concatenate %19, %18 in 1 : vector<8x255xf32>, vector<8x1xf32> -> vector<8x256xf32>
    %21 = vector.broadcast %3 : vector<1x256xf32> to vector<8x256xf32>
    %22 = arith.mulf %20, %21 : vector<8x256xf32>
    %23 = arith.addf %16, %22 : vector<8x256xf32>
    %24 = vector.extract_strided_slice %0 {offsets = [0, 0], sizes = [24, 32], strides = [1, 1]} : vector<72x32xbf16> to vector<24x32xbf16>
    %cst_8 = arith.constant dense<0.000000e+00> : vector<24x256xf32>
    %25 = tpu.matmul %24, %6, %cst_8 {dimension_numbers = #tpu.dot_dimension_numbers<[1], [0], [0], [1], [0, 0, 1, 1], [], []>} : vector<24x32xbf16>, vector<32x256xbf16>, vector<24x256xf32> -> vector<24x256xf32>
    %26 = vector.extract_strided_slice %25 {offsets = [8, 0], sizes = [8, 256], strides = [1, 1]} : vector<24x256xf32> to vector<8x256xf32>
    %cst_9 = arith.constant 0.000000e+00 : f32
    %27 = vector.broadcast %cst_9 : f32 to vector<8x16xf32>
    %28 = vector.extract_strided_slice %26 {offsets = [0, 0], sizes = [8, 240], strides = [1, 1]} : vector<8x256xf32> to vector<8x240xf32>
    %29 = tpu.concatenate %27, %28 in 1 : vector<8x16xf32>, vector<8x240xf32> -> vector<8x256xf32>
    %30 = arith.addf %23, %29 : vector<8x256xf32>
    %31 = vector.extract_strided_slice %25 {offsets = [0, 0], sizes = [8, 256], strides = [1, 1]} : vector<24x256xf32> to vector<8x256xf32>
    %cst_10 = arith.constant 0.000000e+00 : f32
    %32 = vector.broadcast %cst_10 : f32 to vector<8x17xf32>
    %33 = vector.extract_strided_slice %31 {offsets = [0, 0], sizes = [8, 239], strides = [1, 1]} : vector<8x256xf32> to vector<8x239xf32>
    %34 = tpu.concatenate %32, %33 in 1 : vector<8x17xf32>, vector<8x239xf32> -> vector<8x256xf32>
    %35 = vector.broadcast %2 : vector<1x256xf32> to vector<8x256xf32>
    %36 = arith.mulf %34, %35 : vector<8x256xf32>
    %37 = arith.addf %30, %36 : vector<8x256xf32>
    %38 = vector.extract_strided_slice %25 {offsets = [16, 0], sizes = [8, 256], strides = [1, 1]} : vector<24x256xf32> to vector<8x256xf32>
    %cst_11 = arith.constant 0.000000e+00 : f32
    %39 = vector.broadcast %cst_11 : f32 to vector<8x15xf32>
    %40 = vector.extract_strided_slice %38 {offsets = [0, 0], sizes = [8, 241], strides = [1, 1]} : vector<8x256xf32> to vector<8x241xf32>
    %41 = tpu.concatenate %39, %40 in 1 : vector<8x15xf32>, vector<8x241xf32> -> vector<8x256xf32>
    %42 = vector.broadcast %3 : vector<1x256xf32> to vector<8x256xf32>
    %43 = arith.mulf %41, %42 : vector<8x256xf32>
    %44 = arith.addf %37, %43 : vector<8x256xf32>
    %45 = vector.extract_strided_slice %0 {offsets = [48, 0], sizes = [24, 32], strides = [1, 1]} : vector<72x32xbf16> to vector<24x32xbf16>
    %cst_12 = arith.constant dense<0.000000e+00> : vector<24x256xf32>
    %46 = tpu.matmul %45, %6, %cst_12 {dimension_numbers = #tpu.dot_dimension_numbers<[1], [0], [0], [1], [0, 0, 1, 1], [], []>} : vector<24x32xbf16>, vector<32x256xbf16>, vector<24x256xf32> -> vector<24x256xf32>
    %47 = vector.extract_strided_slice %46 {offsets = [8, 0], sizes = [8, 256], strides = [1, 1]} : vector<24x256xf32> to vector<8x256xf32>
    %cst_13 = arith.constant 0.000000e+00 : f32
    %48 = vector.broadcast %cst_13 : f32 to vector<8x16xf32>
    %49 = vector.extract_strided_slice %47 {offsets = [0, 16], sizes = [8, 240], strides = [1, 1]} : vector<8x256xf32> to vector<8x240xf32>
    %50 = tpu.concatenate %49, %48 in 1 : vector<8x240xf32>, vector<8x16xf32> -> vector<8x256xf32>
    %51 = arith.addf %44, %50 : vector<8x256xf32>
    %52 = vector.extract_strided_slice %46 {offsets = [0, 0], sizes = [8, 256], strides = [1, 1]} : vector<24x256xf32> to vector<8x256xf32>
    %cst_14 = arith.constant 0.000000e+00 : f32
    %53 = vector.broadcast %cst_14 : f32 to vector<8x15xf32>
    %54 = vector.extract_strided_slice %52 {offsets = [0, 15], sizes = [8, 241], strides = [1, 1]} : vector<8x256xf32> to vector<8x241xf32>
    %55 = tpu.concatenate %54, %53 in 1 : vector<8x241xf32>, vector<8x15xf32> -> vector<8x256xf32>
    %56 = vector.broadcast %2 : vector<1x256xf32> to vector<8x256xf32>
    %57 = arith.mulf %55, %56 : vector<8x256xf32>
    %58 = arith.addf %51, %57 : vector<8x256xf32>
    %59 = vector.extract_strided_slice %46 {offsets = [16, 0], sizes = [8, 256], strides = [1, 1]} : vector<24x256xf32> to vector<8x256xf32>
    %cst_15 = arith.constant 0.000000e+00 : f32
    %60 = vector.broadcast %cst_15 : f32 to vector<8x17xf32>
    %61 = vector.extract_strided_slice %59 {offsets = [0, 17], sizes = [8, 239], strides = [1, 1]} : vector<8x256xf32> to vector<8x239xf32>
    %62 = tpu.concatenate %61, %60 in 1 : vector<8x239xf32>, vector<8x17xf32> -> vector<8x256xf32>
    %63 = vector.broadcast %3 : vector<1x256xf32> to vector<8x256xf32>
    %64 = arith.mulf %62, %63 : vector<8x256xf32>
    %65 = arith.addf %58, %64 : vector<8x256xf32>
    %cst_16 = arith.constant 0.000000e+00 : f32
    %66 = vector.broadcast %cst_16 : f32 to vector<8x256xf32>
    %67 = arith.cmpf ogt, %65, %66 : vector<8x256xf32>
    %cst_17 = arith.constant 0.000000e+00 : f32
    %68 = vector.broadcast %cst_17 : f32 to vector<8x256xf32>
    %69 = arith.minimumf %65, %68 : vector<8x256xf32>
    %70 = math.exp %69 : vector<8x256xf32>
    %cst_18 = arith.constant 1.000000e+00 : f32
    %71 = vector.broadcast %cst_18 : f32 to vector<8x256xf32>
    %72 = arith.subf %70, %71 : vector<8x256xf32>
    %73 = arith.select %67, %65, %72 : vector<8x256xi1>, vector<8x256xf32>
    %c0_19 = arith.constant 0 : index
    %c0_20 = arith.constant 0 : index
    %c0_21 = arith.constant 0 : index
    %74 = vector.load %arg4[%c0_19, %c0_20, %c0_21] : memref<1x8x256xf32, #tpu.memory_space<vmem>>, vector<1x8x256xf32>
    %75 = vector.shape_cast %74 : vector<1x8x256xf32> to vector<8x256xf32>
    %76 = vector.shape_cast %73 : vector<8x256xf32> to vector<1x8x256xf32>
    tpu.vector_store %arg4[%c0_19, %c0_20, %c0_21], %76 {strides = array<i32>} : memref<1x8x256xf32, #tpu.memory_space<vmem>>, vector<1x8x256xf32>,
    return
  }
  func.func @transform_0(%arg0: i32) -> (i32, i32, i32) {
    %c0_i32 = arith.constant 0 : i32
    %c0_i32_0 = arith.constant 0 : i32
    %c0_i32_1 = arith.constant 0 : i32
    return %arg0, %c0_i32, %c0_i32_0 : i32, i32, i32
  }
  func.func @transform_1(%arg0: i32) -> (i32, i32) {
    %c0_i32 = arith.constant 0 : i32
    %c0_i32_0 = arith.constant 0 : i32
    %c0_i32_1 = arith.constant 0 : i32
    return %c0_i32, %c0_i32_0 : i32, i32
  }
  func.func @transform_2(%arg0: i32) -> (i32, i32) {
    %c0_i32 = arith.constant 0 : i32
    %c0_i32_0 = arith.constant 0 : i32
    %c0_i32_1 = arith.constant 0 : i32
    return %c0_i32, %c0_i32_0 : i32, i32
  }
  func.func @transform_3(%arg0: i32) -> (i32, i32, i32) {
    %c0_i32 = arith.constant 0 : i32
    %c0_i32_0 = arith.constant 0 : i32
    %c0_i32_1 = arith.constant 0 : i32
    return %arg0, %c0_i32, %c0_i32_0 : i32, i32, i32
  }
}

</mosaic_0001>

<llo_original>
// kernel: conv_elu.1
$region0: #{conv_elu.1}
  #allocation0 [shape = 'u32[]', space=smem, size = 0x4, offset = 0x4, fixed_abs, tag = 'smem constant byte address 0x4 - core index']
  #allocation1 [shape = 'u32[144,128]{1,0:T(1,128)}', space=vmem, size = 0x12000, scoped, tag = 'internal scratch']
  %s0 = inlined_call_operand.vmem [shape: f32[2,32,256], index: 0, kind: input, shape index: {}]
  %s1 = inlined_call_operand.vmem [shape: bf16[72,32], index: 1, kind: input, shape index: {}]
  %s2 = inlined_call_operand.vmem [shape: f32[2,256], index: 2, kind: input, shape index: {}]
  %s3 = inlined_call_operand.vmem [shape: f32[2,8,256], index: 3, kind: output, shape index: {}]
  %s4 = sld [smem:[#allocation0]]
  $region45: #{conv_elu.1} parent=0
    _
  %s6 = ssub.s32 1, %s4
  %s7 = scalar_select 0, %s6, %s4
  loop: start=0, step=1, limit=4
  $region2: #{conv_elu.1} parent=0 // loop_pre_header
    _
  $region3: #{conv_elu.1} parent=0 // loop_header
    %s9 = sphi 0, %s13
    %p10 = scmp.ge.s32.totalorder %s9, 4
    %s19 = sphi 0, %s21
    %s22 = sphi 0, %s19
    %s23 = sphi 0, %s22
    %s39 = sphi 0, %s23
    %s43 = sphi 0, %s43
    %s45 = sphi 0, %s43
    %s46 = sphi 0, %s45
    %s60 = sphi 0, %s46
    %s64 = sphi 0, %s64
    %s66 = sphi 0, %s64
    %s67 = sphi 0, %s66
    %s81 = sphi 0, %s67
    %s87 = sphi 0, %s89
    %s90 = sphi 0, %s87
    %s91 = sphi 0, %s90
    %s107 = sphi 0, %s91
  $region4: #{conv_elu.1} parent=0 // loop_header_branch
    %12 = sbr.rel (%p10) target = $region8
  $region5: #{conv_elu.1} parent=0 // loop_body
    %s14 = ssub.s32 %s9, 1
    %s15 = ssub.s32 %s9, 2
    %s16 = sadd.s32 %s9, 1
    %s17 = ssub.s32 %s9, %s16
    %p18 = scmp.eq.s32.totalorder %s17, 0
    %s20 = sadd.s32 %s19, 1
    %s21 = scalar_select %p18, %s19, %s20
    %p24 = pneg %p18
    %p25 = scmp.eq.s32.totalorder %s9, 1
    %p26 = por %p24, %p25
    %p27 = scmp.ne.s32.totalorder %s19, %s22
    %p28 = scmp.eq.s32.totalorder %s9, 0
    %p29 = por %p27, %p28
    %p30 = scmp.ne.s32.totalorder %s19, %s22
    %p31 = scmp.eq.s32.totalorder %s14, 1
    %p32 = por %p30, %p31
    %p33 = scmp.ne.s32.totalorder %s22, %s23
    %p34 = scmp.eq.s32.totalorder %s14, 0
    %p35 = por %p33, %p34
    %p36 = scmp.ne.s32.totalorder %s22, %s23
    %p37 = scmp.eq.s32.totalorder %s15, 1
    %p38 = por %p36, %p37
    %p40 = scmp.ne.s32.totalorder %s23, %s39
    %p41 = scmp.eq.s32.totalorder %s15, 0
    %p42 = por %p40, %p41
    %s44 = sadd.s32 %s43, 1
    %p47 = scmp.eq.s32.totalorder %s9, 1
    %p48 = scmp.ne.s32.totalorder %s43, %s45
    %p49 = scmp.eq.s32.totalorder %s9, 0
    %p50 = por %p48, %p49
    %p51 = scmp.ne.s32.totalorder %s43, %s45
    %p52 = scmp.eq.s32.totalorder %s14, 1
    %p53 = por %p51, %p52
    %p54 = scmp.ne.s32.totalorder %s45, %s46
    %p55 = scmp.eq.s32.totalorder %s14, 0
    %p56 = por %p54, %p55
    %p57 = scmp.ne.s32.totalorder %s45, %s46
    %p58 = scmp.eq.s32.totalorder %s15, 1
    %p59 = por %p57, %p58
    %p61 = scmp.ne.s32.totalorder %s46, %s60
    %p62 = scmp.eq.s32.totalorder %s15, 0
    %p63 = por %p61, %p62
    %s65 = sadd.s32 %s64, 1
    %p68 = scmp.eq.s32.totalorder %s9, 1
    %p69 = scmp.ne.s32.totalorder %s64, %s66
    %p70 = scmp.eq.s32.totalorder %s9, 0
    %p71 = por %p69, %p70
    %p72 = scmp.ne.s32.totalorder %s64, %s66
    %p73 = scmp.eq.s32.totalorder %s14, 1
    %p74 = por %p72, %p73
    %p75 = scmp.ne.s32.totalorder %s66, %s67
    %p76 = scmp.eq.s32.totalorder %s14, 0
    %p77 = por %p75, %p76
    %p78 = scmp.ne.s32.totalorder %s66, %s67
    %p79 = scmp.eq.s32.totalorder %s15, 1
    %p80 = por %p78, %p79
    %p82 = scmp.ne.s32.totalorder %s67, %s81
    %p83 = scmp.eq.s32.totalorder %s15, 0
    %p84 = por %p82, %p83
    %s85 = ssub.s32 %s9, %s16
    %p86 = scmp.eq.s32.totalorder %s85, 0
    %s88 = sadd.s32 %s87, 1
    %s89 = scalar_select %p86, %s87, %s88
    %p92 = pneg %p86
    %p93 = scmp.eq.s32.totalorder %s9, 1
    %p94 = por %p92, %p93
    %p95 = scmp.ne.s32.totalorder %s87, %s90
    %p96 = scmp.eq.s32.totalorder %s9, 0
    %p97 = por %p95, %p96
    %p98 = scmp.ne.s32.totalorder %s87, %s90
    %p99 = scmp.eq.s32.totalorder %s14, 1
    %p100 = por %p98, %p99
    %p101 = scmp.ne.s32.totalorder %s90, %s91
    %p102 = scmp.eq.s32.totalorder %s14, 0
    %p103 = por %p101, %p102
    %p104 = scmp.ne.s32.totalorder %s90, %s91
    %p105 = scmp.eq.s32.totalorder %s15, 1
    %p106 = por %p104, %p105
    %p108 = scmp.ne.s32.totalorder %s91, %s107
    %p109 = scmp.eq.s32.totalorder %s15, 0
    %p110 = por %p108, %p109
    %p111 = scmp.le.s32.totalorder 1, %s9
    %p112 = scmp.lt.s32.totalorder %s9, 3
    %p113 = pnand %p111, %p112
    %p114 = pneg %p113
    // Predicated region
    $region9: #{conv_elu.1} parent=5 // pred_check
      _
    $region10: #{conv_elu.1} parent=5 // pred_check_branch
      %116 = sbr.rel (%p113) target = $region12
    $region11: #{conv_elu.1} parent=5 // pred_region
      %s117 = ssub.s32 %s9, 1
      // Predicated region
      $region13: #{conv_elu.1} parent=11 // pred_check
        %p118 = pneg %p56
      $region14: #{conv_elu.1} parent=11 // pred_check_branch
        %120 = sbr.rel (%p118) target = $region16
      $region15: #{conv_elu.1} parent=11 // pred_region
        _
      $region16: #{conv_elu.1} parent=11 // pred_fallthru
        _
      // Predicated region
      $region17: #{conv_elu.1} parent=11 // pred_check
        %p121 = pneg %p77
      $region18: #{conv_elu.1} parent=11 // pred_check_branch
        %123 = sbr.rel (%p121) target = $region20
      $region19: #{conv_elu.1} parent=11 // pred_region
        _
      $region20: #{conv_elu.1} parent=11 // pred_fallthru
        _
    $region12: #{conv_elu.1} parent=5 // pred_fallthru
      _
    %p124 = scmp.lt.s32.totalorder %s9, 2
    // Predicated region
    $region21: #{conv_elu.1} parent=5 // pred_check
      %p125 = pneg %p124
    $region22: #{conv_elu.1} parent=5 // pred_check_branch
      %127 = sbr.rel (%p125) target = $region24
    $region23: #{conv_elu.1} parent=5 // pred_region
      // Predicated region
      $region25: #{conv_elu.1} parent=23 // pred_check
        %p128 = pneg %p29
      $region26: #{conv_elu.1} parent=23 // pred_check_branch
        %130 = sbr.rel (%p128) target = $region28
      $region27: #{conv_elu.1} parent=23 // pred_region
        %p131 = scmp.lt.s32.totalorder %s9, 1
        %s132 = scalar_select %p131, %s9, 1
        %s133 = smul.addr %s132, 8
        %s134 = smul.addr %s133, 8
        %s135 = scalar_lea.vmem %s0, %s134
      $region28: #{conv_elu.1} parent=23 // pred_fallthru
        _
    $region24: #{conv_elu.1} parent=5 // pred_fallthru
      _
    %p136 = scmp.le.s32.totalorder 1, %s9
    %p137 = scmp.lt.s32.totalorder %s9, 3
    %p138 = pnand %p136, %p137
    %p139 = pneg %p138
    // Predicated region
    $region29: #{conv_elu.1} parent=5 // pred_check
      _
    $region30: #{conv_elu.1} parent=5 // pred_check_branch
      %141 = sbr.rel (%p138) target = $region32
    $region31: #{conv_elu.1} parent=5 // pred_region
      %s142 = ssub.s32 %s9, 1
      %p143 = scmp.lt.s32.totalorder %s14, 1
      %s144 = scalar_select %p143, %s14, 1
      %s145 = smul.addr %s144, 8
      %s146 = smul.addr %s145, 8
      %s147 = scalar_lea.vmem %s0, %s146
      %p148 = pneg %p35
      %p149 = pneg %p32
      %p150 = pneg %p56
      %p151 = pneg %p53
      %p152 = pneg %p77
      %p153 = pneg %p74
      %p154 = pneg %p103
      %p155 = pneg %p100
      %p156 = scmp.lt.s32.totalorder %s14, 1
      %s157 = scalar_select %p156, %s14, 1
      %s158 = smul.addr %s157, 2
      %s159 = smul.addr %s158, 8
      %s160 = scalar_lea.vmem %s3, %s159
      %p161 = scmp.lt.s32.totalorder %s14, 1
      %s162 = scalar_select %p161, %s14, 1
      %s163 = smul.addr %s162, 8
      %s164 = smul.addr %s163, 8
      %s165 = scalar_lea.vmem %s0, %s164
      %p166 = scmp.lt.s32.totalorder %s14, 1
      %s167 = scalar_select %p166, %s14, 1
      %s168 = smul.addr %s167, 2
      %s169 = smul.addr %s168, 8
      %s170 = scalar_lea.vmem %s3, %s169
      %v172 = vld [vmem:[%s1] sm:$0xf]
      %v173 = vld [vmem:[%s1 + $0x4] sm:$0xf]
      %v174 = vld [vmem:[%s1 + $0x8] sm:$0xf]
      %v175 = vld [vmem:[%s1 + $0xc] sm:$0xf]
      %v176 = vld [vmem:[%s1 + $0x10] sm:$0xf]
      %v177 = vld [vmem:[%s1 + $0x14] sm:$0xf]
      %v178 = vld [vmem:[%s1 + $0x18] sm:$0xf]
      %v179 = vld [vmem:[%s1 + $0x1c] sm:$0xf]
      %v180 = vld [vmem:[%s1 + $0x20] sm:$0xf]
      %v181 = vld [vmem:[%s2] sm:$0xf]
      %v182 = vld [vmem:[%s165] sm:$0xff]
      %v183 = vld [vmem:[%s165 + $0x8] sm:$0xff]
      %v184 = vld [vmem:[%s165 + $0x10] sm:$0xff]
      %v185 = vld [vmem:[%s165 + $0x18] sm:$0xff]
      %v186 = vld [vmem:[%s165 + $0x20] sm:$0xff]
      %v187 = vld [vmem:[%s165 + $0x28] sm:$0xff]
      %v188 = vld [vmem:[%s165 + $0x30] sm:$0xff]
      %v189 = vld [vmem:[%s165 + $0x38] sm:$0xff]
      %v190 = vpack.c.bf16 %v184, %v182
      %v191 = vpack.c.bf16 %v185, %v183
      %v192 = vpack.c.bf16 %v188, %v186
      %v193 = vpack.c.bf16 %v189, %v187
      %v197 = vunpack.c.l.b16 %v175
      %v198 = vunpack.c.l.b16 %v176
      %v199 = vunpack.c.l.b16 %v177
      %v200 = vpack.c.b16 %v198, %v197
      %v201 = vpack.c.b16 %v199, %v199
      %vm202 = vcmask 261120
      %v204 = vsel %vm202, %v200, 0
      %v207 = vsel %vm202, %v201, 0
      %209 = vmatprep.subr.bf16.mxu0 0
      %210 = vmatpush1.bf16.msra.mxu0 0
      %211 = vmatprep.subr.bf16.mxu0 0
      %212 = vmatpush1.bf16.msra.mxu0 0
      %213 = vmatprep.subr.bf16.mxu0 0
      %214 = vmatpush1.bf16.msra.mxu0 0
      %215 = vmatprep.subr.bf16.mxu0 0
      %216 = vmatpush1.bf16.msra.mxu0 0
      %217 = vmatprep.subr.bf16.mxu0 0
      %218 = vmatpush1.bf16.msra.mxu0 0
      %219 = vmatprep.subr.bf16.mxu0 0
      %220 = vmatpush1.bf16.msra.mxu0 0
      %221 = vmatprep.subr.bf16.mxu0 %v193
      %222 = vmatpush1.bf16.msra.mxu0 %v192
      %223 = vmatprep.subr.bf16.mxu0 %v191
      %224 = vmatpush1.bf16.msra.mxu0 %v190
      %225 = vmatprep.subr.bf16.mxu0 0
      %226 = vmatpush2.bf16.msra.mxu0 0
      %227 = vmatprep.subr.bf16.mxu0 0
      %228 = vmatpush2.bf16.msra.mxu0 0
      %229 = vmatprep.subr.bf16.mxu0 0
      %230 = vmatpush2.bf16.msra.mxu0 0
      %231 = vmatprep.subr.bf16.mxu0 0
      %232 = vmatpush2.bf16.msra.mxu0 0
      %233 = vmatprep.subr.bf16.mxu0 0
      %234 = vmatpush2.bf16.msra.mxu0 0
      %235 = vmatprep.subr.bf16.mxu0 0
      %236 = vmatpush2.bf16.msra.mxu0 0
      %237 = vmatprep.subr.bf16.mxu0 0
      %238 = vmatpush2.bf16.msra.mxu0 0
      %239 = vmatprep.subr.bf16.mxu0 0
      %240 = vmatpush2.bf16.msra.mxu0 0
      %241 = vmatprep.mubr.bf16.mxu0 0
      %242 = vmatmul.mubr.bf16.gmra.mxu0 %v204
      %v243 = vpop.f32.mrf.mxu0
      %v244 = vadd.f32 0.0, %v243
      %v245 = vpop.f32.mrf.mxu0
      %v246 = vadd.f32 0.0, %v245
      %v247 = vpop.f32.mrf.mxu0
      %v248 = vadd.f32 0.0, %v247
      %v249 = vpop.f32.mrf.mxu0
      %v250 = vadd.f32 0.0, %v249
      %251 = vmatprep.mubr.bf16.mxu0 0
      %252 = vmatmul.mubr.bf16.gmra.mxu0 %v207
      %v253 = vpop.f32.mrf.mxu0
      %v254 = vadd.f32 0.0, %v253
      %v255 = vpop.f32.mrf.mxu0
      %v256 = vadd.f32 0.0, %v255
      %v257 = vpop.f32.mrf.mxu0
      %v258 = vpop.f32.mrf.mxu0
      %259 = vdwg.mxu0
      %262 = vrot.lane.b32.xlu0 %v244, 1
      %v263 = vpop.permute.xlu0 %262
      %264 = vrot.lane.b32.xlu0 %v246, 1
      %v265 = vpop.permute.xlu0 %264
      %vm266 = vcmask 7168
      %v267 = vsel %vm266, %v263, %v265
      %v270 = vsel %vm266, 0.0, %v263
      %v272 = vlaneseq
      %v273 = vshrl.u32 %v272, 7
      %v274 = vsub.s32 0, %v273
      %v275 = vrot.slane %v181, %v274
      %v276 = vlaneseq
      %v277 = vshrl.u32 %v276, 7
      %v278 = vsub.s32 2, %v277
      %v279 = vrot.slane %v181, %v278
      %v282 = vlaneseq
      %v283 = vshrl.u32 %v282, 7
      %v284 = vsub.s32 0, %v283
      %v285 = vrot.slane %v275, %v284
      %v286 = vlaneseq
      %v287 = vshrl.u32 %v286, 7
      %v288 = vsub.s32 0, %v287
      %v289 = vrot.slane %v279, %v288
      %v290 = vmul.f32 %v270, %v285
      %v291 = vmul.f32 %v267, %v289
      %v292 = vadd.f32 %v248, %v290
      %v293 = vadd.f32 %v250, %v291
      %296 = vrot.lane.b32.xlu0 %v254, 127
      %v297 = vpop.permute.xlu0 %296
      %298 = vrot.lane.b32.xlu0 %v256, 127
      %v299 = vpop.permute.xlu0 %298
      %vm300 = vcmask 1039360
      %v301 = vsel %vm300, %v297, %v299
      %v304 = vsel %vm300, %v299, 0.0
      %v305 = vlaneseq
      %v306 = vshrl.u32 %v305, 7
      %v307 = vsub.s32 1, %v306
      %v308 = vrot.slane %v181, %v307
      %v309 = vlaneseq
      %v310 = vshrl.u32 %v309, 7
      %v311 = vsub.s32 3, %v310
      %v312 = vrot.slane %v181, %v311
      %v315 = vlaneseq
      %v316 = vshrl.u32 %v315, 7
      %v317 = vsub.s32 1, %v316
      %v318 = vrot.slane %v308, %v317
      %v319 = vlaneseq
      %v320 = vshrl.u32 %v319, 7
      %v321 = vsub.s32 1, %v320
      %v322 = vrot.slane %v312, %v321
      %v323 = vmul.f32 %v301, %v318
      %v324 = vmul.f32 %v304, %v322
      %v325 = vadd.f32 %v292, %v323
      %v326 = vadd.f32 %v293, %v324
      %v330 = vunpack.c.l.b16 %v172
      %v331 = vunpack.c.l.b16 %v173
      %v332 = vunpack.c.l.b16 %v174
      %v333 = vpack.c.b16 %v331, %v330
      %v334 = vpack.c.b16 %v332, %v332
      %v336 = vsel %vm202, %v333, 0
      %v339 = vsel %vm202, %v334, 0
      %341 = vmatprep.subr.bf16.mxu0 0
      %342 = vmatpush1.bf16.msra.mxu0 0
      %343 = vmatprep.subr.bf16.mxu0 0
      %344 = vmatpush1.bf16.msra.mxu0 0
      %345 = vmatprep.subr.bf16.mxu0 0
      %346 = vmatpush1.bf16.msra.mxu0 0
      %347 = vmatprep.subr.bf16.mxu0 0
      %348 = vmatpush1.bf16.msra.mxu0 0
      %349 = vmatprep.subr.bf16.mxu0 0
      %350 = vmatpush1.bf16.msra.mxu0 0
      %351 = vmatprep.subr.bf16.mxu0 0
      %352 = vmatpush1.bf16.msra.mxu0 0
      %353 = vmatprep.subr.bf16.mxu0 %v193
      %354 = vmatpush1.bf16.msra.mxu0 %v192
      %355 = vmatprep.subr.bf16.mxu0 %v191
      %356 = vmatpush1.bf16.msra.mxu0 %v190
      %357 = vmatprep.subr.bf16.mxu0 0
      %358 = vmatpush2.bf16.msra.mxu0 0
      %359 = vmatprep.subr.bf16.mxu0 0
      %360 = vmatpush2.bf16.msra.mxu0 0
      %361 = vmatprep.subr.bf16.mxu0 0
      %362 = vmatpush2.bf16.msra.mxu0 0
      %363 = vmatprep.subr.bf16.mxu0 0
      %364 = vmatpush2.bf16.msra.mxu0 0
      %365 = vmatprep.subr.bf16.mxu0 0
      %366 = vmatpush2.bf16.msra.mxu0 0
      %367 = vmatprep.subr.bf16.mxu0 0
      %368 = vmatpush2.bf16.msra.mxu0 0
      %369 = vmatprep.subr.bf16.mxu0 0
      %370 = vmatpush2.bf16.msra.mxu0 0
      %371 = vmatprep.subr.bf16.mxu0 0
      %372 = vmatpush2.bf16.msra.mxu0 0
      %373 = vmatprep.mubr.bf16.mxu0 0
      %374 = vmatmul.mubr.bf16.gmra.mxu0 %v336
      %v375 = vpop.f32.mrf.mxu0
      %v376 = vadd.f32 0.0, %v375
      %v377 = vpop.f32.mrf.mxu0
      %v378 = vadd.f32 0.0, %v377
      %v379 = vpop.f32.mrf.mxu0
      %v380 = vadd.f32 0.0, %v379
      %v381 = vpop.f32.mrf.mxu0
      %v382 = vadd.f32 0.0, %v381
      %383 = vmatprep.mubr.bf16.mxu0 0
      %384 = vmatmul.mubr.bf16.gmra.mxu0 %v339
      %v385 = vpop.f32.mrf.mxu0
      %v386 = vadd.f32 0.0, %v385
      %v387 = vpop.f32.mrf.mxu0
      %v388 = vadd.f32 0.0, %v387
      %v389 = vpop.f32.mrf.mxu0
      %v390 = vpop.f32.mrf.mxu0
      %391 = vdwg.mxu0
      %394 = vrot.lane.b32.xlu0 %v380, 16
      %v395 = vpop.permute.xlu0 %394
      %396 = vrot.lane.b32.xlu0 %v382, 16
      %v397 = vpop.permute.xlu0 %396
      %vm398 = vcmask 130048
      %v399 = vsel %vm398, %v395, %v397
      %v402 = vsel %vm398, 0.0, %v395
      %v403 = vadd.f32 %v325, %v402
      %v404 = vadd.f32 %v326, %v399
      %407 = vrot.lane.b32.xlu0 %v376, 17
      %v408 = vpop.permute.xlu0 %407
      %409 = vrot.lane.b32.xlu0 %v378, 17
      %v410 = vpop.permute.xlu0 %409
      %vm411 = vcmask 138240
      %v412 = vsel %vm411, %v408, %v410
      %v415 = vsel %vm411, 0.0, %v408
      %v416 = vmul.f32 %v415, %v285
      %v417 = vmul.f32 %v412, %v289
      %v418 = vadd.f32 %v403, %v416
      %v419 = vadd.f32 %v404, %v417
      %422 = vrot.lane.b32.xlu0 %v386, 15
      %v423 = vpop.permute.xlu0 %422
      %424 = vrot.lane.b32.xlu0 %v388, 15
      %v425 = vpop.permute.xlu0 %424
      %vm426 = vcmask 121856
      %v427 = vsel %vm426, %v423, %v425
      %v430 = vsel %vm426, 0.0, %v423
      %v431 = vmul.f32 %v430, %v318
      %v432 = vmul.f32 %v427, %v322
      %v433 = vadd.f32 %v418, %v431
      %v434 = vadd.f32 %v419, %v432
      %v438 = vunpack.c.l.b16 %v178
      %v439 = vunpack.c.l.b16 %v179
      %v440 = vunpack.c.l.b16 %v180
      %v441 = vpack.c.b16 %v439, %v438
      %v442 = vpack.c.b16 %v440, %v440
      %v444 = vsel %vm202, %v441, 0
      %v447 = vsel %vm202, %v442, 0
      %449 = vmatprep.subr.bf16.mxu0 0
      %450 = vmatpush1.bf16.msra.mxu0 0
      %451 = vmatprep.subr.bf16.mxu0 0
      %452 = vmatpush1.bf16.msra.mxu0 0
      %453 = vmatprep.subr.bf16.mxu0 0
      %454 = vmatpush1.bf16.msra.mxu0 0
      %455 = vmatprep.subr.bf16.mxu0 0
      %456 = vmatpush1.bf16.msra.mxu0 0
      %457 = vmatprep.subr.bf16.mxu0 0
      %458 = vmatpush1.bf16.msra.mxu0 0
      %459 = vmatprep.subr.bf16.mxu0 0
      %460 = vmatpush1.bf16.msra.mxu0 0
      %461 = vmatprep.subr.bf16.mxu0 %v193
      %462 = vmatpush1.bf16.msra.mxu0 %v192
      %463 = vmatprep.subr.bf16.mxu0 %v191
      %464 = vmatpush1.bf16.msra.mxu0 %v190
      %465 = vmatprep.subr.bf16.mxu0 0
      %466 = vmatpush2.bf16.msra.mxu0 0
      %467 = vmatprep.subr.bf16.mxu0 0
      %468 = vmatpush2.bf16.msra.mxu0 0
      %469 = vmatprep.subr.bf16.mxu0 0
      %470 = vmatpush2.bf16.msra.mxu0 0
      %471 = vmatprep.subr.bf16.mxu0 0
      %472 = vmatpush2.bf16.msra.mxu0 0
      %473 = vmatprep.subr.bf16.mxu0 0
      %474 = vmatpush2.bf16.msra.mxu0 0
      %475 = vmatprep.subr.bf16.mxu0 0
      %476 = vmatpush2.bf16.msra.mxu0 0
      %477 = vmatprep.subr.bf16.mxu0 0
      %478 = vmatpush2.bf16.msra.mxu0 0
      %479 = vmatprep.subr.bf16.mxu0 0
      %480 = vmatpush2.bf16.msra.mxu0 0
      %481 = vmatprep.mubr.bf16.mxu0 0
      %482 = vmatmul.mubr.bf16.gmra.mxu0 %v444
      %v483 = vpop.f32.mrf.mxu0
      %v484 = vadd.f32 0.0, %v483
      %v485 = vpop.f32.mrf.mxu0
      %v486 = vadd.f32 0.0, %v485
      %v487 = vpop.f32.mrf.mxu0
      %v488 = vadd.f32 0.0, %v487
      %v489 = vpop.f32.mrf.mxu0
      %v490 = vadd.f32 0.0, %v489
      %491 = vmatprep.mubr.bf16.mxu0 0
      %492 = vmatmul.mubr.bf16.gmra.mxu0 %v447
      %v493 = vpop.f32.mrf.mxu0
      %v494 = vadd.f32 0.0, %v493
      %v495 = vpop.f32.mrf.mxu0
      %v496 = vadd.f32 0.0, %v495
      %v497 = vpop.f32.mrf.mxu0
      %v498 = vpop.f32.mrf.mxu0
      %499 = vdwg.mxu0
      %502 = vrot.lane.b32.xlu0 %v488, 112
      %v503 = vpop.permute.xlu0 %502
      %504 = vrot.lane.b32.xlu0 %v490, 112
      %v505 = vpop.permute.xlu0 %504
      %vm506 = vcmask 916480
      %v507 = vsel %vm506, %v503, %v505
      %v510 = vsel %vm506, %v505, 0.0
      %v511 = vadd.f32 %v433, %v507
      %v512 = vadd.f32 %v434, %v510
      %515 = vrot.lane.b32.xlu0 %v484, 113
      %v516 = vpop.permute.xlu0 %515
      %517 = vrot.lane.b32.xlu0 %v486, 113
      %v518 = vpop.permute.xlu0 %517
      %vm519 = vcmask 924672
      %v520 = vsel %vm519, %v516, %v518
      %v523 = vsel %vm519, %v518, 0.0
      %v524 = vmul.f32 %v520, %v285
      %v525 = vmul.f32 %v523, %v289
      %v526 = vadd.f32 %v511, %v524
      %v527 = vadd.f32 %v512, %v525
      %530 = vrot.lane.b32.xlu0 %v494, 111
      %v531 = vpop.permute.xlu0 %530
      %532 = vrot.lane.b32.xlu0 %v496, 111
      %v533 = vpop.permute.xlu0 %532
      %vm534 = vcmask 908288
      %v535 = vsel %vm534, %v531, %v533
      %v538 = vsel %vm534, %v533, 0.0
      %v539 = vmul.f32 %v535, %v318
      %v540 = vmul.f32 %v538, %v322
      %v541 = vadd.f32 %v526, %v539
      %v542 = vadd.f32 %v527, %v540
      %vm543 = vcmp.gt.f32.partialorder %v541, 0.0
      %vm544 = vcmp.gt.f32.partialorder %v542, 0.0
      %v545 = vmin.f32 %v541, 0.0
      %v546 = vmin.f32 %v542, 0.0
      %v547 = vmul.f32 %v545, 1.442695
      %v548 = vpow.pop %v547
      %v549 = vmul.f32 %v546, 1.442695
      %v550 = vpow.pop %v549
      %v551 = vsub.f32 %v548, 1.0
      %v552 = vsub.f32 %v550, 1.0
      %v553 = vsel %vm543, %v541, %v551
      %v554 = vsel %vm544, %v542, %v552
      %555 = vst [vmem:[%s170] sm:$0xff] %v553
      %556 = vst [vmem:[%s170 + $0x8] sm:$0xff] %v554
      %p557 = scmp.lt.s32.totalorder %s14, 1
      %s558 = scalar_select %p557, %s14, 1
      %s559 = smul.addr %s558, 2
      %s560 = smul.addr %s559, 8
      %s561 = scalar_lea.vmem %s3, %s560
      // Predicated region
      $region33: #{conv_elu.1} parent=31 // pred_check
        %p562 = pneg %p100
      $region34: #{conv_elu.1} parent=31 // pred_check_branch
        %564 = sbr.rel (%p562) target = $region36
      $region35: #{conv_elu.1} parent=31 // pred_region
        _
      $region36: #{conv_elu.1} parent=31 // pred_fallthru
        _
    $region32: #{conv_elu.1} parent=5 // pred_fallthru
      _
    %p565 = scmp.le.s32.totalorder 2, %s9
    // Predicated region
    $region37: #{conv_elu.1} parent=5 // pred_check
      %p566 = pneg %p565
    $region38: #{conv_elu.1} parent=5 // pred_check_branch
      %568 = sbr.rel (%p566) target = $region40
    $region39: #{conv_elu.1} parent=5 // pred_region
      %s569 = ssub.s32 %s9, 2
      // Predicated region
      $region41: #{conv_elu.1} parent=39 // pred_check
        %p570 = pneg %p106
      $region42: #{conv_elu.1} parent=39 // pred_check_branch
        %572 = sbr.rel (%p570) target = $region44
      $region43: #{conv_elu.1} parent=39 // pred_region
        %p573 = scmp.lt.s32.totalorder %s15, 1
        %s574 = scalar_select %p573, %s15, 1
        %s575 = smul.addr %s574, 2
        %s576 = smul.addr %s575, 8
        %s577 = scalar_lea.vmem %s3, %s576
      $region44: #{conv_elu.1} parent=39 // pred_fallthru
        _
    $region40: #{conv_elu.1} parent=5 // pred_fallthru
      _
  $region6: #{conv_elu.1} parent=0 // loop_footer
    %s13 = sadd.s32 1, %s9
  $region7: #{conv_elu.1} parent=0 // loop_footer_branch
    %8 = sbr.rel target = $region3
  $region8: #{conv_elu.1} parent=0 // loop_exit
    _

</llo_original>
